<compile_context>
chip_gen: v7x
topology: tpu7x:2x2x1
jax: 0.10.0
libtpu: 0.0.40
codegen_flags: <defaults>
</compile_context>

<pallas_src>
import functools

import jax
import jax.numpy as jnp
from jax.experimental import pallas as pl
from jax.experimental.pallas import tpu as pltpu


def _round_up(n, m):
    return ((n + m - 1) // m) * m


def _vmem_capacity_bytes():
    try:
        return int(pltpu.get_tpu_info().vmem_capacity_bytes)
    except Exception:
        return 64 << 20          # conservative (v7x-sized) fallback


# ----------------------------------------------------------------------------
# Kernel 1: global max pool over the flattened spatial axis.
# ----------------------------------------------------------------------------
def _pool_kernel(x_ref, pool_ref, *, valid_last, s_tile):
    """Grid (row_tiles, s_tiles): running max over the S (lane) axis,
    accumulated directly in the resident f32 output block."""
    k = pl.program_id(1)
    last_k = pl.num_programs(1) - 1

    @pl.when(k == 0)
    def _init():
        pool_ref[...] = jnp.full_like(pool_ref, -jnp.inf)

    def _accumulate(tile):
        # (row_tile, s_tile) -> (row_tile, 1): cross-lane max (XLU) then
        # running max (VPU) in f32.
        tile_max = jnp.max(tile, axis=-1, keepdims=True).astype(jnp.float32)
        pool_ref[...] = jnp.maximum(pool_ref[...], tile_max)

    if valid_last == s_tile:
        # S divides evenly (or single full-extent tile): one unmasked path.
        _accumulate(x_ref[...])
    else:
        # Only the final S tile is partial; full tiles pay nothing extra.
        @pl.when(k != last_k)
        def _full_tile():
            _accumulate(x_ref[...])

        @pl.when(k == last_k)
        def _partial_tile():
            tile = x_ref[...]
            lane = jax.lax.broadcasted_iota(jnp.int32, tile.shape, 1)
            neg_inf = jnp.asarray(-jnp.inf, dtype=tile.dtype)
            _accumulate(jnp.where(lane < valid_last, tile, neg_inf))


def _global_max_pool(x2d, *, s_tile=None, row_tile=None):
    """x2d: (R, S) -> (R, 1) float32 row-wise max (Pallas pooling kernel)."""
    R, S = x2d.shape
    itemsize = jnp.dtype(x2d.dtype).itemsize
    sub_pack = max(1, 4 // itemsize)          # values per 32-bit sublane slot
    row_align = 8 * sub_pack                  # 8 for f32, 16 for bf16

    vmem_cap = _vmem_capacity_bytes()
    # Double-buffered input budget: ~1/8 of VMEM capacity (16 MiB on the
    # 128 MiB v5e/v6e, 8 MiB on the 64 MiB v7x).
    in_budget = max(vmem_cap // 8, 2 << 20)

    if row_tile is None:
        if R % row_align != 0:
            # Full-extent row block (always legal); only suboptimal for the
            # unusual case of a huge, non-8-multiple B*C.
            row_tile = R
        else:
            # Cap rows so a >= 512-lane S tile still fits the double buffer.
            max_rows = max(row_align,
                           (in_budget // (2 * 512 * itemsize))
                           // row_align * row_align)
            row_tile = min(R, max_rows)
            # Prefer >= 2 row tiles so v7x's two TensorCores can split the
            # pooling rows (harmless on single-core v5e/v6e).
            if row_tile == R and R >= 2 * row_align:
                row_tile = _round_up(pl.cdiv(R, 2), row_align)
    num_row_tiles = pl.cdiv(R, row_tile)

    if s_tile is None:
        max_lanes = in_budget // (2 * row_tile * itemsize)
        s_tile = max(128, (max_lanes // 128) * 128)
    if s_tile >= S:
        s_tile = S                            # single full-extent S tile
    num_s_tiles = pl.cdiv(S, s_tile)
    valid_last = S - (num_s_tiles - 1) * s_tile   # static; ==s_tile if aligned

    # Actual VMEM footprint of the chosen tiling (no double counting):
    # double-buffered input block + double-buffered lane-padded output block
    # + slack.  Capped at half of physical VMEM (32 MiB v7x, 64 MiB v5e/v6e).
    footprint = (2 * row_tile * s_tile * itemsize
                 + 2 * _round_up(row_tile, 8) * 128 * 4
                 + (2 << 20))
    vmem_limit = int(min(max(footprint, 4 << 20), vmem_cap // 2))

    grid_spec = pltpu.PrefetchScalarGridSpec(
        num_scalar_prefetch=0,
        grid=(num_row_tiles, num_s_tiles),
        in_specs=[pl.BlockSpec((row_tile, s_tile), lambda r, k: (r, k))],
        out_specs=pl.BlockSpec((row_tile, 1), lambda r, k: (r, 0)),
    )

    kernel = functools.partial(_pool_kernel, valid_last=valid_last,
                               s_tile=s_tile)
    return pl.pallas_call(
        kernel,
        out_shape=jax.ShapeDtypeStruct((R, 1), jnp.float32),
        grid_spec=grid_spec,
        compiler_params=pltpu.CompilerParams(
            # Rows are independent -> "parallel" (v7x megacore shards them);
            # S is the reduction -> trailing "arbitrary".
            dimension_semantics=("parallel", "arbitrary"),
            vmem_limit_bytes=vmem_limit,
        ),
    )(x2d)


# ----------------------------------------------------------------------------
# Kernel 2: tiny head (conv1 -> folded BN -> ReLU -> conv2) on pooled feats.
# ----------------------------------------------------------------------------
def _head_kernel(pooled_ref, w1t_ref, b1_ref, bn_scale_ref, bn_bias_ref,
                 w2t_ref, b2_ref, out_ref):
    pooled = pooled_ref[...]                                     # (B, C) f32
    # conv1: 1x1 Conv1d(in_dim -> feat_dim) on a length-1 sequence == linear.
    h = jnp.dot(pooled, w1t_ref[...], preferred_element_type=jnp.float32)
    h = h + b1_ref[...]
    # BatchNorm1d (inference) folded to per-channel scale / bias, then ReLU.
    h = h * bn_scale_ref[...] + bn_bias_ref[...]
    h = jnp.maximum(h, 0.0)
    # Dropout(0.2) is identity at inference time.
    # conv2: 1x1 Conv1d(feat_dim -> 3) == linear.
    out = jnp.dot(h, w2t_ref[...], preferred_element_type=jnp.float32)
    out_ref[...] = (out + b2_ref[...]).astype(out_ref.dtype)


# ----------------------------------------------------------------------------
# Parameters / forward / reference.
# ----------------------------------------------------------------------------
def init_thead_params(key, in_dim, feat_dim, out_dim=3, dtype=jnp.float32):
    """Deterministic init mirroring THead._init_weights:
       conv weights ~ N(0, 0.001), conv biases = 0,
       BN gamma = 1, beta = 0, running_mean = 0, running_var = 1."""
    k1, k2 = jax.random.split(key, 2)
    return {
        "w1": jax.random.normal(k1, (feat_dim, in_dim), dtype) * 0.001,
        "b1": jnp.zeros((feat_dim,), dtype),
        "bn_gamma": jnp.ones((feat_dim,), dtype),
        "bn_beta": jnp.zeros((feat_dim,), dtype),
        "bn_mean": jnp.zeros((feat_dim,), dtype),
        "bn_var": jnp.ones((feat_dim,), dtype),
        "w2": jax.random.normal(k2, (out_dim, feat_dim), dtype) * 0.001,
        "b2": jnp.zeros((out_dim,), dtype),
    }


def thead_forward(x, params, eps=1e-5, s_tile=None, row_tile=None):
    """x: (B, in_dim, H, W) float (f32 or bf16)  ->  (B, 3) float32."""
    B, C, H, W = x.shape
    F = params["w1"].shape[0]
    O = params["w2"].shape[0]
    S = H * W

    # Free metadata reshape of contiguous NCHW to (B*C, S): keeps sublanes
    # fully packed in the pooling kernel regardless of C.
    x2d = x.reshape(B * C, S)
    pooled = _global_max_pool(x2d, s_tile=s_tile, row_tile=row_tile)
    pooled = pooled.reshape(B, C)

    # Fold BatchNorm1d (inference) into a per-channel scale / bias (f32).
    gamma = params["bn_gamma"].astype(jnp.float32)
    inv_std = 1.0 / jnp.sqrt(params["bn_var"].astype(jnp.float32) + eps)
    bn_scale = (gamma * inv_std).reshape(1, F)
    bn_bias = (params["bn_beta"].astype(jnp.float32)
               - params["bn_mean"].astype(jnp.float32) * gamma * inv_std
               ).reshape(1, F)
    w1t = params["w1"].astype(jnp.float32).T                     # (C, F)
    b1 = params["b1"].astype(jnp.float32).reshape(1, F)
    w2t = params["w2"].astype(jnp.float32).T                     # (F, O)
    b2 = params["b2"].astype(jnp.float32).reshape(1, O)

    # Tiny head: gridless pallas_call (all operands whole-array resident in
    # VMEM; the matmuls are noise next to the pooling DMA).
    return pl.pallas_call(
        _head_kernel,
        out_shape=jax.ShapeDtypeStruct((B, O), jnp.float32),
    )(pooled, w1t, b1, bn_scale, bn_bias, w2t, b2)


def thead_reference(x, params, eps=1e-5):
    """Pure-JAX reference of the PyTorch forward (inference mode)."""
    B, C, H, W = x.shape
    pooled = jnp.max(x.reshape(B, C, H * W).astype(jnp.float32), axis=-1)
    h = jnp.dot(pooled, params["w1"].T, precision="highest") + params["b1"]
    h = (h - params["bn_mean"]) / jnp.sqrt(params["bn_var"] + eps)
    h = h * params["bn_gamma"] + params["bn_beta"]
    h = jnp.maximum(h, 0.0)
    return jnp.dot(h, params["w2"].T, precision="highest") + params["b2"]


if __name__ == "__main__":
    # Small shapes consistent with the module (FLAGS.feat_ts -> 32 synthetic).
    B, IN_DIM, H, W = 2, 4, 16, 16
    FEAT_DIM = 32

    key = jax.random.PRNGKey(0)
    kx, kp, kx2, kx3 = jax.random.split(key, 4)
    x = jax.random.normal(kx, (B, IN_DIM, H, W), jnp.float32)
    params = init_thead_params(kp, IN_DIM, FEAT_DIM)

    # 1) Default tiling (single S tile, single row tile at these shapes).
    out = jax.block_until_ready(thead_forward(x, params))
    ref = thead_reference(x, params)
    assert out.shape == (B, 3)
    assert jnp.allclose(out, ref, atol=1e-5, rtol=1e-5)

    # 2) Forced multi-tile S grid (exercises the running-max accumulator).
    out_tiled = jax.block_until_ready(thead_forward(x, params, s_tile=128))
    assert jnp.allclose(out_tiled, ref, atol=1e-5, rtol=1e-5)

    # 3) Odd spatial size (exercises in-kernel masking of the partial S tile,
    #    replacing the old wrapper-side -inf pad copy).
    x_odd = jax.random.normal(kx2, (B, IN_DIM, 13, 13), jnp.float32)
    out_odd = jax.block_until_ready(thead_forward(x_odd, params, s_tile=128))
    ref_odd = thead_reference(x_odd, params)
    assert jnp.allclose(out_odd, ref_odd, atol=1e-5, rtol=1e-5)

    # 4) Multiple row tiles (exercises the "parallel" rows grid axis).
    x_rows = jax.random.normal(kx3, (4, IN_DIM, 16, 16), jnp.float32)
    out_rows = jax.block_until_ready(
        thead_forward(x_rows, params, s_tile=128, row_tile=8))
    ref_rows = thead_reference(x_rows, params)
    assert jnp.allclose(out_rows, ref_rows, atol=1e-5, rtol=1e-5)

    print("KERNEL_OK")
</pallas_src>

<mosaic_0001>
module attributes {stable_mosaic.version = 11 : i64} {
  func.func @_pool_kernel(%arg0: i32, %arg1: i32, %arg2: memref<8x256xf32, #tpu.memory_space<vmem>>, %arg3: memref<8x1xf32, #tpu.memory_space<vmem>>) attributes {dimension_semantics = [#tpu.dimension_semantics<parallel>, #tpu.dimension_semantics<arbitrary>], iteration_bounds = array<i64: 1, 1>, scalar_prefetch = 0 : i64, scratch_operands = 0 : i64, tpu.core_type = #tpu.core_type<tc>, window_params = [{transform_indices = @transform_0, window_bounds = array<i64: 8, 256>}, {transform_indices = @transform_1, window_bounds = array<i64: 8, 1>}]} {
    %c0_i32 = arith.constant 0 : i32
    %0 = arith.cmpi eq, %arg1, %c0_i32 : i32
    %1 = arith.extui %0 : i1 to i32
    %c0_i32_0 = arith.constant 0 : i32
    %2 = arith.cmpi ne, %1, %c0_i32_0 : i32
    scf.if %2 {
      %cst_6 = arith.constant 0xFF800000 : f32
      %9 = vector.broadcast %cst_6 : f32 to vector<8x1xf32>
      %c0_7 = arith.constant 0 : index
      %c0_8 = arith.constant 0 : index
      %10 = vector.load %arg3[%c0_7, %c0_8] : memref<8x1xf32, #tpu.memory_space<vmem>>, vector<8x1xf32>
      tpu.vector_store %arg3[%c0_7, %c0_8], %9 {strides = array<i32>} : memref<8x1xf32, #tpu.memory_space<vmem>>, vector<8x1xf32>,
    } else {
    }
    %c0 = arith.constant 0 : index
    %c0_1 = arith.constant 0 : index
    %3 = vector.load %arg2[%c0, %c0_1] : memref<8x256xf32, #tpu.memory_space<vmem>>, vector<8x256xf32>
    %cst = arith.constant dense<0xFF800000> : vector<8xf32>
    %4 = vector.multi_reduction <maximumf>, %3, %cst [1] : vector<8x256xf32> to vector<8xf32>
    %5 = vector.shape_cast %4 : vector<8xf32> to vector<8x1xf32>
    %c0_2 = arith.constant 0 : index
    %c0_3 = arith.constant 0 : index
    %6 = vector.load %arg3[%c0_2, %c0_3] : memref<8x1xf32, #tpu.memory_space<vmem>>, vector<8x1xf32>
    %7 = arith.maximumf %6, %5 : vector<8x1xf32>
    %c0_4 = arith.constant 0 : index
    %c0_5 = arith.constant 0 : index
    %8 = vector.load %arg3[%c0_4, %c0_5] : memref<8x1xf32, #tpu.memory_space<vmem>>, vector<8x1xf32>
    tpu.vector_store %arg3[%c0_4, %c0_5], %7 {strides = array<i32>} : memref<8x1xf32, #tpu.memory_space<vmem>>, vector<8x1xf32>,
    return
  }
  func.func @transform_0(%arg0: i32, %arg1: i32) -> (i32, i32) {
    %c0_i32 = arith.constant 0 : i32
    return %arg0, %arg1 : i32, i32
  }
  func.func @transform_1(%arg0: i32, %arg1: i32) -> (i32, i32) {
    %c0_i32 = arith.constant 0 : i32
    %c0_i32_0 = arith.constant 0 : i32
    return %arg0, %c0_i32 : i32, i32
  }
}

</mosaic_0001>

<llo_original>
// kernel: tpu_custom_call.1
$region0: #{tpu_custom_call.1}
  #allocation0 [shape = 'u32[]', space=smem, size = 0x4, offset = 0x4, fixed_abs, tag = 'smem constant byte address 0x4 - core index']
  #allocation1 [shape = 'u32[144,128]{1,0:T(1,128)}', space=vmem, size = 0x12000, scoped, tag = 'internal scratch']
  %s0 = inlined_call_operand.hbm [shape: f32[8,256], index: 0, kind: input, shape index: {}]
  %s1 = inlined_call_operand.vmem [shape: f32[8,1], index: 1, kind: output, shape index: {}]
  %s2 = sld [smem:[#allocation0]]
  $region22: #{tpu_custom_call.1} parent=0
    _
  %s4 = ssub.s32 1, %s2
  %s5 = scalar_select 0, %s4, %s2
  $region1: #{tpu_custom_call.1} parent=0
    #allocation2 [shape = 'u8[8192]{0}', space=vmem, size = 0x2000, scoped, tag = 'input window, operand 0, single buffered']
    #allocation3 [shape = 's32[1]{0}', space=sflag, size = 0x4, scoped, tag = 'scoped memory for tpu_custom_call.1']
    %6 = vsyncpa [#allocation3], 0
    // Predicated region
    $region2: #{tpu_custom_call.1} parent=1 // pred_check
      _
    $region3: #{tpu_custom_call.1} parent=1 // pred_check_branch
      %8 = sbr.rel (0) target = $region5
    $region4: #{tpu_custom_call.1} parent=1 // pred_region
      %s10 = ssub.s32 256, 256
      %11 = vsyncadd [#allocation3], %s10
      %s13 = sshll.u32 [#allocation2], 4
      %s14 = int_to_ptr.vmem [resolvable:$true] %s13
      %16 = dma.hbm_to_vmem [thread:$0]  %s0, 256, %s14, [#allocation3]
    $region5: #{tpu_custom_call.1} parent=1 // pred_fallthru
      _
    // Predicated region
    $region6: #{tpu_custom_call.1} parent=1 // pred_check
      _
    $region7: #{tpu_custom_call.1} parent=1 // pred_check_branch
      %18 = sbr.rel (0) target = $region9
    $region8: #{tpu_custom_call.1} parent=1 // pred_region
      %19 = dma.done [#allocation3], 256
    $region9: #{tpu_custom_call.1} parent=1 // pred_fallthru
      _
    %p20 = scmp.eq.s32.totalorder 0, 0
    // Predicated region
    $region10: #{tpu_custom_call.1} parent=1 // pred_check
      %p21 = pneg %p20
    $region11: #{tpu_custom_call.1} parent=1 // pred_check_branch
      %23 = sbr.rel (%p21) target = $region13
    $region12: #{tpu_custom_call.1} parent=1 // pred_region
      %vm24 = vcmask 7168
      %25 = vst.msk [vmem:[%s1] sm:$0xff] %vm24, -inf
    $region13: #{tpu_custom_call.1} parent=1 // pred_fallthru
      _
    %v26 = vld [vmem:[#allocation2] sm:$0xff]
    %v27 = vld [vmem:[#allocation2 + $0x8] sm:$0xff]
    %v28 = vmax.f32 %v26, %v27
    %29 = vmax.xlane.f32.xlu0 %v28
    %v30 = vpop.xlane.xlu0 %29
    %v31 = vld [vmem:[%s1] sm:$0xff]
    %v32 = vmax.f32 %v31, %v30
    %vm33 = vcmask 7168
    %34 = vst.msk [vmem:[%s1] sm:$0xff] %vm33, %v32
    // Predicated region
    $region14: #{tpu_custom_call.1} parent=1 // pred_check
      _
    $region15: #{tpu_custom_call.1} parent=1 // pred_check_branch
      %36 = sbr.rel (0) target = $region17
    $region16: #{tpu_custom_call.1} parent=1 // pred_region
      _
    $region17: #{tpu_custom_call.1} parent=1 // pred_fallthru
      _
    // Predicated region
    $region18: #{tpu_custom_call.1} parent=1 // pred_check
      _
    $region19: #{tpu_custom_call.1} parent=1 // pred_check_branch
      %38 = sbr.rel (0) target = $region21
    $region20: #{tpu_custom_call.1} parent=1 // pred_region
      _
    $region21: #{tpu_custom_call.1} parent=1 // pred_fallthru
      _
    %39 = vsyncpa [#allocation3], 1

</llo_original>
